<compile_context>
chip_gen: v5e
topology: v5e:2x2
jax: 0.10.0
libtpu: 0.0.40
codegen_flags: <defaults>
</compile_context>

<pallas_src>
import jax
import jax.numpy as jnp
from jax.experimental import pallas as pl
from jax.experimental.pallas import tpu as pltpu


# ----------------------------------------------------------------------------
# Kernels.  x blocks are (C, T_HW): channels on sublanes, spatial on lanes.
# ----------------------------------------------------------------------------

def _conv_stats_kernel(x_ref, w_ref, b_ref, sum_ref, sq_ref):
    # x_ref: (C_in, T) ; w_ref: (C_out, C_in) ; b_ref: (C_out, 1)
    # 1x1 conv stays in-register; only (C,1) partial sums hit HBM.
    y = jnp.dot(w_ref[...], x_ref[...],
                preferred_element_type=jnp.float32) + b_ref[...]
    sum_ref[...] = jnp.sum(y, axis=1, keepdims=True)       # (C, 1)
    sq_ref[...] = jnp.sum(y * y, axis=1, keepdims=True)    # (C, 1)


def _wsp_pool_kernel(x_ref, wf_ref, bf_ref, num_ref, den_ref):
    # BN is pre-folded into (wf, bf), so this pass only reads x.
    x = x_ref[...]                                          # (C, T), storage dtype
    w = jnp.dot(wf_ref[...], x,
                preferred_element_type=jnp.float32) + bf_ref[...]
    w = jnp.maximum(w, 0.0)                                 # ReLU, f32
    xf = x.astype(jnp.float32)                              # f32 VPU math (v5e safe)
    num_ref[...] = jnp.sum(xf * w, axis=1, keepdims=True)   # (C, 1)
    den_ref[...] = jnp.sum(w, axis=1, keepdims=True)        # (C, 1)


# ----------------------------------------------------------------------------
# Wrapper.
# ----------------------------------------------------------------------------

def _pick_t_hw(hw, c, itemsize, max_block_bytes=2 * 1024 * 1024):
    """Largest multiple-of-128 divisor of HW whose (C, T) block fits the budget."""
    if hw % 128 != 0:
        return hw  # fall back to a single full-extent spatial block
    cap = max(128, (max_block_bytes // max(1, c * itemsize)) // 128 * 128)
    t = min(hw, cap)
    while hw % t != 0:
        t -= 128
    return t


def wsp_block_forward(x_nchw, conv_w, conv_b, gamma, beta, eps=1e-5,
                      t_hw=None, storage_dtype=None):
    N, C, H, W = x_nchw.shape
    HW = H * W

    if storage_dtype is None:
        storage_dtype = jnp.float32
    itemsize = jnp.dtype(storage_dtype).itemsize

    # NCHW -> (N, C, HW): pure reshape, no transpose pass over HBM.
    x3 = x_nchw.reshape(N, C, HW).astype(storage_dtype)

    if t_hw is None:
        t_hw = _pick_t_hw(HW, C, itemsize)
    assert HW % t_hw == 0, "t_hw must divide H*W"
    n_t = HW // t_hw

    w_full = conv_w.reshape(C, C).astype(jnp.float32)       # (C_out, C_in)
    w1 = w_full.astype(storage_dtype)
    b1 = conv_b.reshape(C, 1).astype(jnp.float32)

    grid = (N, n_t)
    x_spec = pl.BlockSpec((None, C, t_hw), lambda n, t: (n, 0, t))
    w_spec = pl.BlockSpec((C, C), lambda n, t: (0, 0))
    b_spec = pl.BlockSpec((C, 1), lambda n, t: (0, 0))
    part_spec = pl.BlockSpec((None, None, C, 1), lambda n, t: (n, t, 0, 0))
    cparams = pltpu.CompilerParams(
        # Both axes fully parallel (disjoint outputs): v7x megacore can split
        # over spatial tiles even when N == 1.
        dimension_semantics=("parallel", "parallel"),
        vmem_limit_bytes=32 * 1024 * 1024,   # explicit; safe on v5e/v6e/v7x
    )

    # Pass 1: 1x1 conv in-register + per-(batch, spatial-tile) channel stats.
    sums, sqs = pl.pallas_call(
        _conv_stats_kernel,
        out_shape=(
            jax.ShapeDtypeStruct((N, n_t, C, 1), jnp.float32),
            jax.ShapeDtypeStruct((N, n_t, C, 1), jnp.float32),
        ),
        grid=grid,
        in_specs=[x_spec, w_spec, b_spec],
        out_specs=(part_spec, part_spec),
        compiler_params=cparams,
    )(x3, w1, b1)

    # Training-mode BatchNorm2d statistics over (N, H, W), biased variance.
    total = float(N * HW)
    mean = jnp.sum(sums, axis=(0, 1, 3)) / total                       # (C,)
    var = jnp.maximum(jnp.sum(sqs, axis=(0, 1, 3)) / total - mean * mean, 0.0)
    scale = gamma.astype(jnp.float32) / jnp.sqrt(var + eps)            # (C,)
    shift = beta.astype(jnp.float32) - mean * scale                    # (C,)

    # Fold BN affine into the conv so pass 2 only reads x.
    wf = (w_full * scale[:, None]).astype(storage_dtype)               # (C, C)
    bf = (conv_b.astype(jnp.float32) * scale + shift).reshape(C, 1)    # (C, 1)

    # Pass 2: (folded conv -> ReLU) weights + weighted spatial pooling partials.
    nums, dens = pl.pallas_call(
        _wsp_pool_kernel,
        out_shape=(
            jax.ShapeDtypeStruct((N, n_t, C, 1), jnp.float32),
            jax.ShapeDtypeStruct((N, n_t, C, 1), jnp.float32),
        ),
        grid=grid,
        in_specs=[x_spec, w_spec, b_spec],
        out_specs=(part_spec, part_spec),
        compiler_params=cparams,
    )(x3, wf, bf)

    num = jnp.sum(nums, axis=(1, 3))     # (N, C)
    den = jnp.sum(dens, axis=(1, 3))     # (N, C)
    return num / (den + 1e-4)


# ----------------------------------------------------------------------------
# Pure-JAX reference mirroring PyTorch semantics (training-mode BN).
# ----------------------------------------------------------------------------

def wsp_block_ref(x_nchw, conv_w, conv_b, gamma, beta, eps=1e-5):
    N, C, H, W = x_nchw.shape
    xw = jnp.einsum("nchw,oc->nohw", x_nchw, conv_w.reshape(C, C),
                    precision=jax.lax.Precision.HIGHEST)
    xw = xw + conv_b.reshape(1, C, 1, 1)
    mean = xw.mean(axis=(0, 2, 3))
    var = xw.var(axis=(0, 2, 3))   # biased, as used for normalization in training
    xw = (xw - mean.reshape(1, C, 1, 1)) / jnp.sqrt(var.reshape(1, C, 1, 1) + eps)
    xw = xw * gamma.reshape(1, C, 1, 1) + beta.reshape(1, C, 1, 1)
    xw = jnp.maximum(xw, 0.0)
    num = (x_nchw * xw).sum(axis=(2, 3))
    den = xw.sum(axis=(2, 3)) + 1e-4
    return num / den


if __name__ == "__main__":
    key = jax.random.PRNGKey(0)
    k1, k2, k3 = jax.random.split(key, 3)
    N, C, H, W = 2, 4, 16, 16

    x = jax.random.normal(k1, (N, C, H, W), dtype=jnp.float32)
    # nn.Conv2d(channels, channels, (1,1)): weight (C, C, 1, 1), bias (C,)
    conv_w = jax.random.normal(k2, (C, C, 1, 1), dtype=jnp.float32) * 0.5
    conv_b = jax.random.normal(k3, (C,), dtype=jnp.float32) * 0.1
    # nn.BatchNorm2d(channels) default init: gamma=1, beta=0
    gamma = jnp.ones((C,), jnp.float32)
    beta = jnp.zeros((C,), jnp.float32)

    ref = wsp_block_ref(x, conv_w, conv_b, gamma, beta)

    # f32 path, forcing 2 spatial tiles (exercises the tiled partial-reduction
    # path + glue combine).  Tolerance allows for TPU matmul pass precision.
    out = wsp_block_forward(x, conv_w, conv_b, gamma, beta, t_hw=128)
    out = jax.block_until_ready(out)
    assert out.shape == (N, C)
    assert jnp.allclose(out, ref, rtol=1e-2, atol=1e-2), (out, ref)

    # bf16 HBM-storage path (halved x traffic), f32 accumulation in-kernel.
    out_bf16 = wsp_block_forward(x, conv_w, conv_b, gamma, beta,
                                 storage_dtype=jnp.bfloat16)
    out_bf16 = jax.block_until_ready(out_bf16)
    assert out_bf16.shape == (N, C)
    assert jnp.allclose(out_bf16, ref, rtol=5e-2, atol=5e-2), (out_bf16, ref)

    print("KERNEL_OK")
</pallas_src>

<mosaic_0001>
module attributes {stable_mosaic.version = 11 : i64} {
  func.func @_conv_stats_kernel(%arg0: i32, %arg1: i32, %arg2: memref<1x4x128xf32, #tpu.memory_space<vmem>>, %arg3: memref<4x4xf32, #tpu.memory_space<vmem>>, %arg4: memref<4x1xf32, #tpu.memory_space<vmem>>, %arg5: memref<1x1x4x1xf32, #tpu.memory_space<vmem>>, %arg6: memref<1x1x4x1xf32, #tpu.memory_space<vmem>>) attributes {dimension_semantics = [#tpu.dimension_semantics<parallel>, #tpu.dimension_semantics<parallel>], iteration_bounds = array<i64: 2, 2>, scalar_prefetch = 0 : i64, scratch_operands = 0 : i64, tpu.core_type = #tpu.core_type<tc>, window_params = [{transform_indices = @transform_0, window_bounds = array<i64: 1, 4, 128>}, {pipeline_mode = #tpu.pipeline_mode<synchronous>, transform_indices = @transform_1, window_bounds = array<i64: 4, 4>}, {pipeline_mode = #tpu.pipeline_mode<synchronous>, transform_indices = @transform_2, window_bounds = array<i64: 4, 1>}, {transform_indices = @transform_3, window_bounds = array<i64: 1, 1, 4, 1>}, {transform_indices = @transform_4, window_bounds = array<i64: 1, 1, 4, 1>}]} {
    %c0 = arith.constant 0 : index
    %c0_0 = arith.constant 0 : index
    %0 = vector.load %arg3[%c0, %c0_0] : memref<4x4xf32, #tpu.memory_space<vmem>>, vector<4x4xf32>
    %c0_1 = arith.constant 0 : index
    %c0_2 = arith.constant 0 : index
    %c0_3 = arith.constant 0 : index
    %1 = vector.load %arg2[%c0_1, %c0_2, %c0_3] : memref<1x4x128xf32, #tpu.memory_space<vmem>>, vector<1x4x128xf32>
    %2 = vector.shape_cast %1 : vector<1x4x128xf32> to vector<4x128xf32>
    %cst = arith.constant dense<0.000000e+00> : vector<4x128xf32>
    %3 = tpu.matmul %0, %2, %cst {dimension_numbers = #tpu.dot_dimension_numbers<[1], [0], [0], [1], [0, 0, 1, 1], [], []>} : vector<4x4xf32>, vector<4x128xf32>, vector<4x128xf32> -> vector<4x128xf32>
    %c0_4 = arith.constant 0 : index
    %c0_5 = arith.constant 0 : index
    %4 = vector.load %arg4[%c0_4, %c0_5] : memref<4x1xf32, #tpu.memory_space<vmem>>, vector<4x1xf32>
    %5 = vector.broadcast %4 : vector<4x1xf32> to vector<4x128xf32>
    %6 = arith.addf %3, %5 : vector<4x128xf32>
    %cst_6 = arith.constant dense<0.000000e+00> : vector<4xf32>
    %7 = vector.multi_reduction <add>, %6, %cst_6 [1] : vector<4x128xf32> to vector<4xf32>
    %8 = vector.shape_cast %7 : vector<4xf32> to vector<4x1xf32>
    %c0_7 = arith.constant 0 : index
    %c0_8 = arith.constant 0 : index
    %c0_9 = arith.constant 0 : index
    %c0_10 = arith.constant 0 : index
    %9 = vector.load %arg5[%c0_7, %c0_8, %c0_9, %c0_10] : memref<1x1x4x1xf32, #tpu.memory_space<vmem>>, vector<1x1x4x1xf32>
    %10 = vector.shape_cast %9 : vector<1x1x4x1xf32> to vector<4x1xf32>
    %11 = vector.shape_cast %8 : vector<4x1xf32> to vector<1x1x4x1xf32>
    tpu.vector_store %arg5[%c0_7, %c0_8, %c0_9, %c0_10], %11 {strides = array<i32>} : memref<1x1x4x1xf32, #tpu.memory_space<vmem>>, vector<1x1x4x1xf32>,
    %12 = arith.mulf %6, %6 : vector<4x128xf32>
    %cst_11 = arith.constant dense<0.000000e+00> : vector<4xf32>
    %13 = vector.multi_reduction <add>, %12, %cst_11 [1] : vector<4x128xf32> to vector<4xf32>
    %14 = vector.shape_cast %13 : vector<4xf32> to vector<4x1xf32>
    %c0_12 = arith.constant 0 : index
    %c0_13 = arith.constant 0 : index
    %c0_14 = arith.constant 0 : index
    %c0_15 = arith.constant 0 : index
    %15 = vector.load %arg6[%c0_12, %c0_13, %c0_14, %c0_15] : memref<1x1x4x1xf32, #tpu.memory_space<vmem>>, vector<1x1x4x1xf32>
    %16 = vector.shape_cast %15 : vector<1x1x4x1xf32> to vector<4x1xf32>
    %17 = vector.shape_cast %14 : vector<4x1xf32> to vector<1x1x4x1xf32>
    tpu.vector_store %arg6[%c0_12, %c0_13, %c0_14, %c0_15], %17 {strides = array<i32>} : memref<1x1x4x1xf32, #tpu.memory_space<vmem>>, vector<1x1x4x1xf32>,
    return
  }
  func.func @transform_0(%arg0: i32, %arg1: i32) -> (i32, i32, i32) {
    %c0_i32 = arith.constant 0 : i32
    %c0_i32_0 = arith.constant 0 : i32
    return %arg0, %c0_i32, %arg1 : i32, i32, i32
  }
  func.func @transform_1(%arg0: i32, %arg1: i32) -> (i32, i32) {
    %c0_i32 = arith.constant 0 : i32
    %c0_i32_0 = arith.constant 0 : i32
    %c0_i32_1 = arith.constant 0 : i32
    return %c0_i32, %c0_i32_0 : i32, i32
  }
  func.func @transform_2(%arg0: i32, %arg1: i32) -> (i32, i32) {
    %c0_i32 = arith.constant 0 : i32
    %c0_i32_0 = arith.constant 0 : i32
    %c0_i32_1 = arith.constant 0 : i32
    return %c0_i32, %c0_i32_0 : i32, i32
  }
  func.func @transform_3(%arg0: i32, %arg1: i32) -> (i32, i32, i32, i32) {
    %c0_i32 = arith.constant 0 : i32
    %c0_i32_0 = arith.constant 0 : i32
    %c0_i32_1 = arith.constant 0 : i32
    return %arg0, %arg1, %c0_i32, %c0_i32_0 : i32, i32, i32, i32
  }
  func.func @transform_4(%arg0: i32, %arg1: i32) -> (i32, i32, i32, i32) {
    %c0_i32 = arith.constant 0 : i32
    %c0_i32_0 = arith.constant 0 : i32
    %c0_i32_1 = arith.constant 0 : i32
    return %arg0, %arg1, %c0_i32, %c0_i32_0 : i32, i32, i32, i32
  }
}

</mosaic_0001>

<llo_original>
// kernel: tpu_custom_call.1
$region0: #{tpu_custom_call.1}
  #allocation0 [shape = 'u32[]', space=smem, size = 0x4, offset = 0x4, fixed_abs, tag = 'smem constant byte address 0x4 - core index']
  #allocation1 [shape = 'u32[72,128]{1,0:T(1,128)}', space=vmem, size = 0x9000, scoped, tag = 'internal scratch']
  %s0 = inlined_call_operand.hbm [shape: f32[2,4,256], index: 0, kind: input, shape index: {}]
  %s1 = inlined_call_operand.vmem [shape: f32[4,4], index: 1, kind: input, shape index: {}]
  %s2 = inlined_call_operand.vmem [shape: f32[4,1], index: 2, kind: input, shape index: {}]
  %s3 = inlined_call_operand.vmem [shape: f32[2,2,4,1], index: 3, kind: output, shape index: {0}]
  %s4 = inlined_call_operand.vmem [shape: f32[2,2,4,1], index: 4, kind: output, shape index: {1}]
  %5 = xla_tuple %s3, %s4
  %s6 = sld [smem:[#allocation0]]
  $region57: #{tpu_custom_call.1} parent=0
    _
  %s8 = ssub.s32 1, %s6
  %s9 = scalar_select 0, %s8, %s6
  $region1: #{tpu_custom_call.1} parent=0
    #allocation2 [shape = 'u8[4096]{0}', space=vmem, size = 0x1000, scoped, tag = 'input window, operand 0']
    #allocation3 [shape = 's32[2]{0}', space=sflag, size = 0x8, scoped, tag = 'scoped memory for tpu_custom_call.1']
    %10 = vsyncpa [#allocation3], 0
    %s11 = scalar_lea.sflag [#allocation3], 1
    %12 = vsyncpa %s11, 0
    loop: start=0, step=1, limit=6
    $region2: #{tpu_custom_call.1} parent=1 // loop_pre_header
      _
    $region3: #{tpu_custom_call.1} parent=1 // loop_header
      %s14 = sphi 0, %s18
      %p15 = scmp.ge.s32.totalorder %s14, 6
      %s21 = sphi 0, %s33
      %s22 = sphi 0, %s29
      %s23 = sphi 0, %s21
      %s24 = sphi 0, %s22
      %s25 = sphi 0, %s23
      %s26 = sphi 0, %s24
      %s38 = sphi 0, %s40
      %s41 = sphi 0, %s38
      %s42 = sphi 0, %s41
      %s58 = sphi 0, %s42
      %s62 = sphi 0, %s62
      %s64 = sphi 0, %s62
      %s65 = sphi 0, %s64
      %s79 = sphi 0, %s65
      %s83 = sphi 0, %s83
      %s85 = sphi 0, %s83
      %s86 = sphi 0, %s85
      %s100 = sphi 0, %s86
      %s108 = sphi 0, %s110
      %s111 = sphi 0, %s108
      %s112 = sphi 0, %s111
      %s128 = sphi 0, %s112
      %s136 = sphi 0, %s138
      %s139 = sphi 0, %s136
      %s140 = sphi 0, %s139
      %s156 = sphi 0, %s140
    $region4: #{tpu_custom_call.1} parent=1 // loop_header_branch
      %17 = sbr.rel (%p15) target = $region8
    $region5: #{tpu_custom_call.1} parent=1 // loop_body
      %s19 = ssub.s32 %s14, 1
      %s20 = ssub.s32 %s14, 2
      %s27 = sadd.s32 1, %s22
      %p28 = scmp.ge.s32.totalorder %s27, 2
      %s29 = scalar_select %p28, 0, %s27
      %s30 = sadd.s32 1, %s21
      %s31 = scalar_select %p28, %s30, %s21
      %p32 = scmp.ge.s32.totalorder %s31, 2
      %s33 = scalar_select %p32, 0, %s31
      %s34 = ssub.s32 %s21, %s33
      %s35 = ssub.s32 %s22, %s29
      %s36 = sor.u32 %s34, %s35
      %p37 = scmp.eq.s32.totalorder %s36, 0
      %s39 = sadd.s32 %s38, 1
      %s40 = scalar_select %p37, %s38, %s39
      %p43 = pneg %p37
      %p44 = scmp.eq.s32.totalorder %s14, 3
      %p45 = por %p43, %p44
      %p46 = scmp.ne.s32.totalorder %s38, %s41
      %p47 = scmp.eq.s32.totalorder %s14, 0
      %p48 = por %p46, %p47
      %p49 = scmp.ne.s32.totalorder %s38, %s41
      %p50 = scmp.eq.s32.totalorder %s19, 3
      %p51 = por %p49, %p50
      %p52 = scmp.ne.s32.totalorder %s41, %s42
      %p53 = scmp.eq.s32.totalorder %s19, 0
      %p54 = por %p52, %p53
      %p55 = scmp.ne.s32.totalorder %s41, %s42
      %p56 = scmp.eq.s32.totalorder %s20, 3
      %p57 = por %p55, %p56
      %p59 = scmp.ne.s32.totalorder %s42, %s58
      %p60 = scmp.eq.s32.totalorder %s20, 0
      %p61 = por %p59, %p60
      %s63 = sadd.s32 %s62, 1
      %p66 = scmp.eq.s32.totalorder %s14, 3
      %p67 = scmp.ne.s32.totalorder %s62, %s64
      %p68 = scmp.eq.s32.totalorder %s14, 0
      %p69 = por %p67, %p68
      %p70 = scmp.ne.s32.totalorder %s62, %s64
      %p71 = scmp.eq.s32.totalorder %s19, 3
      %p72 = por %p70, %p71
      %p73 = scmp.ne.s32.totalorder %s64, %s65
      %p74 = scmp.eq.s32.totalorder %s19, 0
      %p75 = por %p73, %p74
      %p76 = scmp.ne.s32.totalorder %s64, %s65
      %p77 = scmp.eq.s32.totalorder %s20, 3
      %p78 = por %p76, %p77
      %p80 = scmp.ne.s32.totalorder %s65, %s79
      %p81 = scmp.eq.s32.totalorder %s20, 0
      %p82 = por %p80, %p81
      %s84 = sadd.s32 %s83, 1
      %p87 = scmp.eq.s32.totalorder %s14, 3
      %p88 = scmp.ne.s32.totalorder %s83, %s85
      %p89 = scmp.eq.s32.totalorder %s14, 0
      %p90 = por %p88, %p89
      %p91 = scmp.ne.s32.totalorder %s83, %s85
      %p92 = scmp.eq.s32.totalorder %s19, 3
      %p93 = por %p91, %p92
      %p94 = scmp.ne.s32.totalorder %s85, %s86
      %p95 = scmp.eq.s32.totalorder %s19, 0
      %p96 = por %p94, %p95
      %p97 = scmp.ne.s32.totalorder %s85, %s86
      %p98 = scmp.eq.s32.totalorder %s20, 3
      %p99 = por %p97, %p98
      %p101 = scmp.ne.s32.totalorder %s86, %s100
      %p102 = scmp.eq.s32.totalorder %s20, 0
      %p103 = por %p101, %p102
      %s104 = ssub.s32 %s21, %s33
      %s105 = ssub.s32 %s22, %s29
      %s106 = sor.u32 %s104, %s105
      %p107 = scmp.eq.s32.totalorder %s106, 0
      %s109 = sadd.s32 %s108, 1
      %s110 = scalar_select %p107, %s108, %s109
      %p113 = pneg %p107
      %p114 = scmp.eq.s32.totalorder %s14, 3
      %p115 = por %p113, %p114
      %p116 = scmp.ne.s32.totalorder %s108, %s111
      %p117 = scmp.eq.s32.totalorder %s14, 0
      %p118 = por %p116, %p117
      %p119 = scmp.ne.s32.totalorder %s108, %s111
      %p120 = scmp.eq.s32.totalorder %s19, 3
      %p121 = por %p119, %p120
      %p122 = scmp.ne.s32.totalorder %s111, %s112
      %p123 = scmp.eq.s32.totalorder %s19, 0
      %p124 = por %p122, %p123
      %p125 = scmp.ne.s32.totalorder %s111, %s112
      %p126 = scmp.eq.s32.totalorder %s20, 3
      %p127 = por %p125, %p126
      %p129 = scmp.ne.s32.totalorder %s112, %s128
      %p130 = scmp.eq.s32.totalorder %s20, 0
      %p131 = por %p129, %p130
      %s132 = ssub.s32 %s21, %s33
      %s133 = ssub.s32 %s22, %s29
      %s134 = sor.u32 %s132, %s133
      %p135 = scmp.eq.s32.totalorder %s134, 0
      %s137 = sadd.s32 %s136, 1
      %s138 = scalar_select %p135, %s136, %s137
      %p141 = pneg %p135
      %p142 = scmp.eq.s32.totalorder %s14, 3
      %p143 = por %p141, %p142
      %p144 = scmp.ne.s32.totalorder %s136, %s139
      %p145 = scmp.eq.s32.totalorder %s14, 0
      %p146 = por %p144, %p145
      %p147 = scmp.ne.s32.totalorder %s136, %s139
      %p148 = scmp.eq.s32.totalorder %s19, 3
      %p149 = por %p147, %p148
      %p150 = scmp.ne.s32.totalorder %s139, %s140
      %p151 = scmp.eq.s32.totalorder %s19, 0
      %p152 = por %p150, %p151
      %p153 = scmp.ne.s32.totalorder %s139, %s140
      %p154 = scmp.eq.s32.totalorder %s20, 3
      %p155 = por %p153, %p154
      %p157 = scmp.ne.s32.totalorder %s140, %s156
      %p158 = scmp.eq.s32.totalorder %s20, 0
      %p159 = por %p157, %p158
      %p160 = scmp.le.s32.totalorder 1, %s14
      %p161 = scmp.lt.s32.totalorder %s14, 5
      %p162 = pnand %p160, %p161
      %p163 = pneg %p162
      // Predicated region
      $region9: #{tpu_custom_call.1} parent=5 // pred_check
        _
      $region10: #{tpu_custom_call.1} parent=5 // pred_check_branch
        %165 = sbr.rel (%p162) target = $region12
      $region11: #{tpu_custom_call.1} parent=5 // pred_region
        %s166 = ssub.s32 %s14, 1
        // Predicated region
        $region13: #{tpu_custom_call.1} parent=11 // pred_check
          %p167 = pneg %p75
        $region14: #{tpu_custom_call.1} parent=11 // pred_check_branch
          %169 = sbr.rel (%p167) target = $region16
        $region15: #{tpu_custom_call.1} parent=11 // pred_region
          _
        $region16: #{tpu_custom_call.1} parent=11 // pred_fallthru
          _
        // Predicated region
        $region17: #{tpu_custom_call.1} parent=11 // pred_check
          %p170 = pneg %p96
        $region18: #{tpu_custom_call.1} parent=11 // pred_check_branch
          %172 = sbr.rel (%p170) target = $region20
        $region19: #{tpu_custom_call.1} parent=11 // pred_region
          _
        $region20: #{tpu_custom_call.1} parent=11 // pred_fallthru
          _
      $region12: #{tpu_custom_call.1} parent=5 // pred_fallthru
        _
      %p173 = scmp.lt.s32.totalorder %s14, 4
      // Predicated region
      $region21: #{tpu_custom_call.1} parent=5 // pred_check
        %p174 = pneg %p173
      $region22: #{tpu_custom_call.1} parent=5 // pred_check_branch
        %176 = sbr.rel (%p174) target = $region24
      $region23: #{tpu_custom_call.1} parent=5 // pred_region
        // Predicated region
        $region25: #{tpu_custom_call.1} parent=23 // pred_check
          %p177 = pneg %p48
        $region26: #{tpu_custom_call.1} parent=23 // pred_check_branch
          %179 = sbr.rel (%p177) target = $region28
        $region27: #{tpu_custom_call.1} parent=23 // pred_region
          %s180 = sand.u32 %s38, 1
          %s181 = scalar_lea.sflag [#allocation3], %s180
          %s182 = sand.u32 %s38, 1
          %s183 = smul.addr %s182, 4
          %s184 = scalar_lea.vmem [#allocation2], %s183
          %186 = vsyncadd %s181, 0
          %s187 = smul.addr %s21, 2
          %s188 = sadd.s32 %s22, %s187
          %s189 = smul.addr %s188, 4
          %s190 = scalar_lea.hbm %s0, %s189
          %s192 = sshll.u32 %s190, 4
          %s193 = int_to_ptr.hbm [resolvable:$true] %s192
          %s194 = sshll.u32 %s184, 4
          %s195 = int_to_ptr.vmem [resolvable:$true] %s194
          %197 = dma.hbm_to_vmem [thread:$0]  %s193, 64, %s195, %s181
        $region28: #{tpu_custom_call.1} parent=23 // pred_fallthru
          _
      $region24: #{tpu_custom_call.1} parent=5 // pred_fallthru
        _
      %p198 = scmp.le.s32.totalorder 1, %s14
      %p199 = scmp.lt.s32.totalorder %s14, 5
      %p200 = pnand %p198, %p199
      %p201 = pneg %p200
      // Predicated region
      $region29: #{tpu_custom_call.1} parent=5 // pred_check
        _
      $region30: #{tpu_custom_call.1} parent=5 // pred_check_branch
        %203 = sbr.rel (%p200) target = $region32
      $region31: #{tpu_custom_call.1} parent=5 // pred_region
        %s204 = ssub.s32 %s14, 1
        %s205 = sand.u32 %s41, 1
        %s206 = scalar_lea.sflag [#allocation3], %s205
        %s207 = sand.u32 %s41, 1
        %s208 = smul.addr %s207, 4
        %s209 = scalar_lea.vmem [#allocation2], %s208
        // Predicated region
        $region33: #{tpu_custom_call.1} parent=31 // pred_check
          %p210 = pneg %p54
        $region34: #{tpu_custom_call.1} parent=31 // pred_check_branch
          %212 = sbr.rel (%p210) target = $region36
        $region35: #{tpu_custom_call.1} parent=31 // pred_region
          %214 = dma.done %s206, 64
        $region36: #{tpu_custom_call.1} parent=31 // pred_fallthru
          _
        %s215 = sand.u32 %s41, 1
        %s216 = scalar_lea.sflag [#allocation3], %s215
        %s217 = sand.u32 %s41, 1
        %s218 = smul.addr %s217, 4
        %s219 = scalar_lea.vmem [#allocation2], %s218
        %p220 = pneg %p54
        %p221 = pneg %p51
        %p222 = pneg %p75
        %p223 = pneg %p72
        %p224 = pneg %p96
        %p225 = pneg %p93
        %p226 = pneg %p124
        %p227 = pneg %p121
        %p228 = scmp.lt.s32.totalorder %s23, 1
        %s229 = scalar_select %p228, %s23, 1
        %p230 = scmp.lt.s32.totalorder %s24, 1
        %s231 = scalar_select %p230, %s24, 1
        %s232 = smul.addr %s229, 2
        %s233 = sadd.s32 %s231, %s232
        %s234 = smul.addr %s233, 4
        %s235 = scalar_lea.vmem %s3, %s234
        %p236 = pneg %p152
        %p237 = pneg %p149
        %p238 = scmp.lt.s32.totalorder %s23, 1
        %s239 = scalar_select %p238, %s23, 1
        %p240 = scmp.lt.s32.totalorder %s24, 1
        %s241 = scalar_select %p240, %s24, 1
        %s242 = smul.addr %s239, 2
        %s243 = sadd.s32 %s241, %s242
        %s244 = smul.addr %s243, 4
        %s245 = scalar_lea.vmem %s4, %s244
        %p246 = scmp.lt.s32.totalorder %s23, 1
        %s247 = scalar_select %p246, %s23, 1
        %p248 = scmp.lt.s32.totalorder %s24, 1
        %s249 = scalar_select %p248, %s24, 1
        %s250 = smul.addr %s247, 2
        %s251 = sadd.s32 %s249, %s250
        %s252 = smul.addr %s251, 4
        %s253 = scalar_lea.vmem %s3, %s252
        %p254 = scmp.lt.s32.totalorder %s23, 1
        %s255 = scalar_select %p254, %s23, 1
        %p256 = scmp.lt.s32.totalorder %s24, 1
        %s257 = scalar_select %p256, %s24, 1
        %s258 = smul.addr %s255, 2
        %s259 = sadd.s32 %s257, %s258
        %s260 = smul.addr %s259, 4
        %s261 = scalar_lea.vmem %s4, %s260
        %v262 = vld [vmem:[%s1] sm:$0xf]
        %v263 = vld [vmem:[%s209] sm:$0xf]
        %v264 = vld [vmem:[%s2] sm:$0xf]
        %266 = vset.pattern.permute.xlu0 0
        %267 = vperm.xlu0 %266, %v264
        %v268 = vpop.permute.xlu0 %267
        %vm270 = vcmask 31744
        %v272 = vsel %vm270, %v262, 0
        %vm274 = vcmask 1043456
        %v276 = vsel %vm274, %v263, 0
        %278 = vmatpush.msra.mxu0 0.0
        %279 = vmatpush.msra.mxu0 0.0
        %280 = vmatpush.msra.mxu0 0.0
        %281 = vmatpush.msra.mxu0 0.0
        %282 = vmatpush.msra.mxu0 0.0
        %283 = vmatpush.msra.mxu0 0.0
        %284 = vmatpush.msra.mxu0 0.0
        %285 = vmatpush.msra.mxu0 0.0
        %286 = vmatpush.msra.mxu0 0.0
        %287 = vmatpush.msra.mxu0 0.0
        %288 = vmatpush.msra.mxu0 0.0
        %289 = vmatpush.msra.mxu0 0.0
        %290 = vmatpush.msra.mxu0 0.0
        %291 = vmatpush.msra.mxu0 0.0
        %292 = vmatpush.msra.mxu0 0.0
        %293 = vmatpush.msra.mxu0 %v276
        %294 = vmatmul.f32.gmra.mxu0 %v272
        %v295 = vpop.f32.mrf.mxu0
        %v296 = vadd.f32 %v268, %v295
        %297 = vdwg.mxu0
        %v298 = vsel %vm274, %v296, 0.0
        %299 = vadd.xlane.f32.xlu0 %v298
        %v300 = vpop.xlane.xlu0 %299
        %vm301 = vcmask 3072
        %302 = vst.msk [vmem:[%s253] sm:$0xf] %vm301, %v300
        %v303 = vmul.f32 %v296, %v296
        %v304 = vsel %vm274, %v303, 0.0
        %305 = vadd.xlane.f32.xlu0 %v304
        %v306 = vpop.xlane.xlu0 %305
        %307 = vst.msk [vmem:[%s261] sm:$0xf] %vm301, %v306
        %p308 = scmp.lt.s32.totalorder %s23, 1
        %s309 = scalar_select %p308, %s23, 1
        %p310 = scmp.lt.s32.totalorder %s24, 1
        %s311 = scalar_select %p310, %s24, 1
        %s312 = smul.addr %s309, 2
        %s313 = sadd.s32 %s311, %s312
        %s314 = smul.addr %s313, 4
        %s315 = scalar_lea.vmem %s3, %s314
        %p316 = scmp.lt.s32.totalorder %s23, 1
        %s317 = scalar_select %p316, %s23, 1
        %p318 = scmp.lt.s32.totalorder %s24, 1
        %s319 = scalar_select %p318, %s24, 1
        %s320 = smul.addr %s317, 2
        %s321 = sadd.s32 %s319, %s320
        %s322 = smul.addr %s321, 4
        %s323 = scalar_lea.vmem %s4, %s322
        // Predicated region
        $region37: #{tpu_custom_call.1} parent=31 // pred_check
          %p324 = pneg %p121
        $region38: #{tpu_custom_call.1} parent=31 // pred_check_branch
          %326 = sbr.rel (%p324) target = $region40
        $region39: #{tpu_custom_call.1} parent=31 // pred_region
          _
        $region40: #{tpu_custom_call.1} parent=31 // pred_fallthru
          _
        // Predicated region
        $region41: #{tpu_custom_call.1} parent=31 // pred_check
          %p327 = pneg %p149
        $region42: #{tpu_custom_call.1} parent=31 // pred_check_branch
          %329 = sbr.rel (%p327) target = $region44
        $region43: #{tpu_custom_call.1} parent=31 // pred_region
          _
        $region44: #{tpu_custom_call.1} parent=31 // pred_fallthru
          _
      $region32: #{tpu_custom_call.1} parent=5 // pred_fallthru
        _
      %p330 = scmp.le.s32.totalorder 2, %s14
      // Predicated region
      $region45: #{tpu_custom_call.1} parent=5 // pred_check
        %p331 = pneg %p330
      $region46: #{tpu_custom_call.1} parent=5 // pred_check_branch
        %333 = sbr.rel (%p331) target = $region48
      $region47: #{tpu_custom_call.1} parent=5 // pred_region
        %s334 = ssub.s32 %s14, 2
        // Predicated region
        $region49: #{tpu_custom_call.1} parent=47 // pred_check
          %p335 = pneg %p127
        $region50: #{tpu_custom_call.1} parent=47 // pred_check_branch
          %337 = sbr.rel (%p335) target = $region52
        $region51: #{tpu_custom_call.1} parent=47 // pred_region
          %p338 = scmp.lt.s32.totalorder %s25, 1
          %s339 = scalar_select %p338, %s25, 1
          %p340 = scmp.lt.s32.totalorder %s26, 1
          %s341 = scalar_select %p340, %s26, 1
          %s342 = smul.addr %s339, 2
          %s343 = sadd.s32 %s341, %s342
          %s344 = smul.addr %s343, 4
          %s345 = scalar_lea.vmem %s3, %s344
        $region52: #{tpu_custom_call.1} parent=47 // pred_fallthru
          _
        // Predicated region
        $region53: #{tpu_custom_call.1} parent=47 // pred_check
          %p346 = pneg %p155
        $region54: #{tpu_custom_call.1} parent=47 // pred_check_branch
          %348 = sbr.rel (%p346) target = $region56
        $region55: #{tpu_custom_call.1} parent=47 // pred_region
          %p349 = scmp.lt.s32.totalorder %s25, 1
          %s350 = scalar_select %p349, %s25, 1
          %p351 = scmp.lt.s32.totalorder %s26, 1
          %s352 = scalar_select %p351, %s26, 1
          %s353 = smul.addr %s350, 2
          %s354 = sadd.s32 %s352, %s353
          %s355 = smul.addr %s354, 4
          %s356 = scalar_lea.vmem %s4, %s355
        $region56: #{tpu_custom_call.1} parent=47 // pred_fallthru
          _
      $region48: #{tpu_custom_call.1} parent=5 // pred_fallthru
        _
    $region6: #{tpu_custom_call.1} parent=1 // loop_footer
      %s18 = sadd.s32 1, %s14
    $region7: #{tpu_custom_call.1} parent=1 // loop_footer_branch
      %13 = sbr.rel target = $region3
    $region8: #{tpu_custom_call.1} parent=1 // loop_exit
      _
    %357 = vsyncpa [#allocation3], 1
    %s358 = scalar_lea.sflag [#allocation3], 1
    %359 = vsyncpa %s358, 1

</llo_original>
